<compile_context>
chip_gen: v7x
topology: tpu7x:2x2x1
jax: 0.10.0
libtpu: 0.0.40
codegen_flags: <defaults>
</compile_context>

<pallas_src>
import jax
import jax.numpy as jnp
from jax.experimental import pallas as pl
from jax.experimental.pallas import tpu as pltpu

NEG_SLOPE = 0.01  # PyTorch nn.LeakyReLU default negative_slope


def _round_up(x, m):
    return ((x + m - 1) // m) * m


def _make_kernel(layer_meta):
    """Build a kernel closure for a fixed layer structure.

    layer_meta: tuple of (has_res: bool, out_pad: int) per hidden layer.
    Ref order: x, then per hidden layer [W (or fused [W|R]), b],
    then W_out, b_out, out.
    """

    def kernel(*refs):
        idx = 0
        fea = refs[idx][...]                        # (TILE_M, P_in) f32
        idx += 1
        for has_res, out_p in layer_meta:
            wmat = refs[idx][...]                   # bf16 (P_in, P_out) or (P_in, 2*P_out)
            idx += 1
            bias = refs[idx][...]                   # f32 (1, P_out)
            idx += 1
            z = jnp.dot(fea.astype(jnp.bfloat16), wmat,
                        preferred_element_type=jnp.float32)
            if has_res:
                h = z[:, :out_p] + bias             # main branch (lane-aligned slice)
                res = z[:, out_p:]                  # residual projection (no bias)
            else:
                h = z + bias
                res = fea                           # nn.Identity residual
            h = jnp.where(h >= 0, h, NEG_SLOPE * h)  # LeakyReLU in f32
            fea = h + res
        w_out = refs[idx][...]
        idx += 1
        b_out = refs[idx][...]
        idx += 1
        out_ref = refs[idx]
        out_ref[...] = (jnp.dot(fea.astype(jnp.bfloat16), w_out,
                                preferred_element_type=jnp.float32) + b_out)

    return kernel


def residual_network_forward(x, params, *, tile_m=512):
    """Forward pass of ResidualNetwork.

    params = {'layers': [(W(in,out), b(1,out), R(in,out) | None), ...],
              'out':    (W_out(in,out), b_out(1,out))}   (unpadded, f32)
    """
    layers = params["layers"]
    w_out, b_out = params["out"]

    batch, in_dim = x.shape
    out_dim = w_out.shape[1]

    dims = [in_dim] + [w.shape[1] for (w, _, _) in layers]
    pdims = [_round_up(d, 128) for d in dims]          # lane-pad every feature dim
    p_out = _round_up(out_dim, 128)

    # Batch tile: multiple of 8 sublanes, capped (mem-roofline sweet spot ~512).
    tile_m = max(8, min(tile_m, _round_up(batch, 8)))
    n_pad = _round_up(batch, tile_m)
    grid = (n_pad // tile_m,)

    # ---- pad / pack operands ------------------------------------------------
    x_p = jnp.zeros((n_pad, pdims[0]), jnp.float32).at[:batch, :in_dim].set(
        x.astype(jnp.float32))

    const_map = lambda i: (0, 0)                       # resident weights: fetched once
    packed = []
    specs = []
    layer_meta = []

    for li, (w, b, r) in enumerate(layers):
        d_in, d_hid = dims[li], dims[li + 1]
        p_in, p_hid = pdims[li], pdims[li + 1]
        has_res = r is not None
        w_p = jnp.zeros((p_in, p_hid), jnp.float32).at[:d_in, :d_hid].set(w)
        if has_res:
            r_p = jnp.zeros((p_in, p_hid), jnp.float32).at[:d_in, :d_hid].set(r)
            wmat = jnp.concatenate([w_p, r_p], axis=1).astype(jnp.bfloat16)  # fused [W|R]
        else:
            wmat = w_p.astype(jnp.bfloat16)
        b_p = jnp.zeros((1, p_hid), jnp.float32).at[:, :d_hid].set(
            jnp.reshape(b, (1, -1)))
        packed += [wmat, b_p]
        specs += [pl.BlockSpec(wmat.shape, const_map),
                  pl.BlockSpec(b_p.shape, const_map)]
        layer_meta.append((has_res, p_hid))

    w_out_p = (jnp.zeros((pdims[-1], p_out), jnp.float32)
               .at[:dims[-1], :out_dim].set(w_out).astype(jnp.bfloat16))
    b_out_p = jnp.zeros((1, p_out), jnp.float32).at[:, :out_dim].set(
        jnp.reshape(b_out, (1, -1)))
    packed += [w_out_p, b_out_p]
    specs += [pl.BlockSpec(w_out_p.shape, const_map),
              pl.BlockSpec(b_out_p.shape, const_map)]

    kernel = _make_kernel(tuple(layer_meta))

    x_spec = pl.BlockSpec((tile_m, pdims[0]), lambda i: (i, 0))
    out_spec = pl.BlockSpec((tile_m, p_out), lambda i: (i, 0))

    # ---- cost estimate & VMEM budget -----------------------------------------
    flops = 0
    for li, (has_res, p_hid) in enumerate(layer_meta):
        width = 2 * p_hid if has_res else p_hid
        flops += 2 * n_pad * pdims[li] * width
    flops += 2 * n_pad * pdims[-1] * p_out
    weight_bytes = sum(int(a.size) * a.dtype.itemsize for a in packed)
    bytes_accessed = int(x_p.size) * 4 + weight_bytes + n_pad * p_out * 4
    cost = pl.CostEstimate(flops=int(flops), transcendentals=0,
                           bytes_accessed=int(bytes_accessed))

    # Resident weights (worst case double-buffered alloc) + double-buffered
    # x/out tiles + headroom; clamp for v7x's 64 MiB physical VMEM friendliness.
    act_bytes = 4 * tile_m * (pdims[0] + p_out)
    vmem_needed = 2 * weight_bytes + 2 * act_bytes + (8 << 20)
    vmem_limit = int(min(max(vmem_needed, 32 << 20), 100 << 20))

    out_p = pl.pallas_call(
        kernel,
        out_shape=jax.ShapeDtypeStruct((n_pad, p_out), jnp.float32),
        grid=grid,
        in_specs=[x_spec] + specs,
        out_specs=out_spec,
        compiler_params=pltpu.CompilerParams(
            dimension_semantics=("parallel",),
            vmem_limit_bytes=vmem_limit),
        cost_estimate=cost,
    )(x_p, *packed)

    return out_p[:batch, :out_dim]


def init_params(key, input_dim, output_dim, hidden_layer_dims):
    """Deterministic synthetic parameters matching the nn.Module shapes."""
    dims = [input_dim] + list(hidden_layer_dims)
    layers = []
    for i in range(len(dims) - 1):
        key, kw, kb, kr = jax.random.split(key, 4)
        fan_in, fan_out = dims[i], dims[i + 1]
        scale = 1.0 / jnp.sqrt(jnp.float32(fan_in))
        # stored already transposed: (in, out)
        w = jax.random.uniform(kw, (fan_in, fan_out), jnp.float32, -scale, scale)
        b = jax.random.uniform(kb, (1, fan_out), jnp.float32, -scale, scale)
        if fan_in != fan_out:
            r = jax.random.uniform(kr, (fan_in, fan_out), jnp.float32, -scale, scale)
        else:
            r = None  # nn.Identity
        layers.append((w, b, r))
    key, kw, kb = jax.random.split(key, 3)
    fan_in = dims[-1]
    scale = 1.0 / jnp.sqrt(jnp.float32(fan_in))
    w_out = jax.random.uniform(kw, (fan_in, output_dim), jnp.float32, -scale, scale)
    b_out = jax.random.uniform(kb, (1, output_dim), jnp.float32, -scale, scale)
    return {"layers": layers, "out": (w_out, b_out)}


def reference_forward(x, params):
    """Plain-JAX f32 reference mirroring the PyTorch forward exactly."""
    fea = x
    for (w, b, r) in params["layers"]:
        h = fea @ w + b
        h = jnp.where(h >= 0, h, NEG_SLOPE * h)
        res = fea @ r if r is not None else fea
        fea = h + res
    w_out, b_out = params["out"]
    return fea @ w_out + b_out


if __name__ == "__main__":
    key = jax.random.PRNGKey(0)
    key, kx, kp = jax.random.split(key, 3)

    batch = 8
    input_dim = 32
    hidden_layer_dims = [64, 64]   # 32->64 uses a residual Linear, 64->64 uses Identity
    output_dim = 16

    x = jax.random.normal(kx, (batch, input_dim), jnp.float32)
    params = init_params(kp, input_dim, output_dim, hidden_layer_dims)

    out = residual_network_forward(x, params)
    out = jax.block_until_ready(out)

    ref = reference_forward(x, params)
    assert out.shape == (batch, output_dim)
    # bf16 matmul operands (f32 accumulation) => looser tolerance than pure f32.
    max_err = float(jnp.max(jnp.abs(out - ref)))
    assert max_err < 3e-2, f"mismatch vs reference: max abs err {max_err}"

    print("KERNEL_OK")
</pallas_src>

<mosaic_0001>
module attributes {stable_mosaic.version = 11 : i64} {
  func.func @kernel(%arg0: i32, %arg1: memref<8x128xf32, #tpu.memory_space<vmem>>, %arg2: memref<128x256xbf16, #tpu.memory_space<vmem>>, %arg3: memref<1x128xf32, #tpu.memory_space<vmem>>, %arg4: memref<128x128xbf16, #tpu.memory_space<vmem>>, %arg5: memref<1x128xf32, #tpu.memory_space<vmem>>, %arg6: memref<128x128xbf16, #tpu.memory_space<vmem>>, %arg7: memref<1x128xf32, #tpu.memory_space<vmem>>, %arg8: memref<8x128xf32, #tpu.memory_space<vmem>>) attributes {dimension_semantics = [#tpu.dimension_semantics<parallel>], iteration_bounds = array<i64: 1>, scalar_prefetch = 0 : i64, scratch_operands = 0 : i64, tpu.core_type = #tpu.core_type<tc>, window_params = [{transform_indices = @transform_0, window_bounds = array<i64: 8, 128>}, {pipeline_mode = #tpu.pipeline_mode<synchronous>, transform_indices = @transform_1, window_bounds = array<i64: 128, 256>}, {pipeline_mode = #tpu.pipeline_mode<synchronous>, transform_indices = @transform_2, window_bounds = array<i64: 1, 128>}, {pipeline_mode = #tpu.pipeline_mode<synchronous>, transform_indices = @transform_3, window_bounds = array<i64: 128, 128>}, {pipeline_mode = #tpu.pipeline_mode<synchronous>, transform_indices = @transform_4, window_bounds = array<i64: 1, 128>}, {pipeline_mode = #tpu.pipeline_mode<synchronous>, transform_indices = @transform_5, window_bounds = array<i64: 128, 128>}, {pipeline_mode = #tpu.pipeline_mode<synchronous>, transform_indices = @transform_6, window_bounds = array<i64: 1, 128>}, {transform_indices = @transform_7, window_bounds = array<i64: 8, 128>}]} {
    %c0 = arith.constant 0 : index
    %c0_0 = arith.constant 0 : index
    %0 = vector.load %arg1[%c0, %c0_0] : memref<8x128xf32, #tpu.memory_space<vmem>>, vector<8x128xf32>
    %c0_1 = arith.constant 0 : index
    %c0_2 = arith.constant 0 : index
    %1 = vector.load %arg2[%c0_1, %c0_2] : memref<128x256xbf16, #tpu.memory_space<vmem>>, vector<128x256xbf16>
    %c0_3 = arith.constant 0 : index
    %c0_4 = arith.constant 0 : index
    %2 = vector.load %arg3[%c0_3, %c0_4] : memref<1x128xf32, #tpu.memory_space<vmem>>, vector<1x128xf32>
    %3 = arith.truncf %0 : vector<8x128xf32> to vector<8x128xbf16>
    %cst = arith.constant dense<0.000000e+00> : vector<8x256xf32>
    %4 = tpu.matmul %3, %1, %cst {dimension_numbers = #tpu.dot_dimension_numbers<[1], [0], [0], [1], [0, 0, 1, 1], [], []>} : vector<8x128xbf16>, vector<128x256xbf16>, vector<8x256xf32> -> vector<8x256xf32>
    %5 = vector.extract_strided_slice %4 {offsets = [0, 0], sizes = [8, 128], strides = [1, 1]} : vector<8x256xf32> to vector<8x128xf32>
    %6 = vector.broadcast %2 : vector<1x128xf32> to vector<8x128xf32>
    %7 = arith.addf %5, %6 : vector<8x128xf32>
    %8 = vector.extract_strided_slice %4 {offsets = [0, 128], sizes = [8, 128], strides = [1, 1]} : vector<8x256xf32> to vector<8x128xf32>
    %cst_5 = arith.constant 0.000000e+00 : f32
    %9 = vector.broadcast %cst_5 : f32 to vector<8x128xf32>
    %10 = arith.cmpf oge, %7, %9 : vector<8x128xf32>
    %cst_6 = arith.constant 0.00999999977 : f32
    %11 = vector.broadcast %cst_6 : f32 to vector<8x128xf32>
    %12 = arith.mulf %11, %7 : vector<8x128xf32>
    %13 = arith.select %10, %7, %12 : vector<8x128xi1>, vector<8x128xf32>
    %14 = arith.addf %13, %8 : vector<8x128xf32>
    %c0_7 = arith.constant 0 : index
    %c0_8 = arith.constant 0 : index
    %15 = vector.load %arg4[%c0_7, %c0_8] : memref<128x128xbf16, #tpu.memory_space<vmem>>, vector<128x128xbf16>
    %c0_9 = arith.constant 0 : index
    %c0_10 = arith.constant 0 : index
    %16 = vector.load %arg5[%c0_9, %c0_10] : memref<1x128xf32, #tpu.memory_space<vmem>>, vector<1x128xf32>
    %17 = arith.truncf %14 : vector<8x128xf32> to vector<8x128xbf16>
    %cst_11 = arith.constant dense<0.000000e+00> : vector<8x128xf32>
    %18 = tpu.matmul %17, %15, %cst_11 {dimension_numbers = #tpu.dot_dimension_numbers<[1], [0], [0], [1], [0, 0, 1, 1], [], []>} : vector<8x128xbf16>, vector<128x128xbf16>, vector<8x128xf32> -> vector<8x128xf32>
    %19 = vector.broadcast %16 : vector<1x128xf32> to vector<8x128xf32>
    %20 = arith.addf %18, %19 : vector<8x128xf32>
    %cst_12 = arith.constant 0.000000e+00 : f32
    %21 = vector.broadcast %cst_12 : f32 to vector<8x128xf32>
    %22 = arith.cmpf oge, %20, %21 : vector<8x128xf32>
    %cst_13 = arith.constant 0.00999999977 : f32
    %23 = vector.broadcast %cst_13 : f32 to vector<8x128xf32>
    %24 = arith.mulf %23, %20 : vector<8x128xf32>
    %25 = arith.select %22, %20, %24 : vector<8x128xi1>, vector<8x128xf32>
    %26 = arith.addf %25, %14 : vector<8x128xf32>
    %c0_14 = arith.constant 0 : index
    %c0_15 = arith.constant 0 : index
    %27 = vector.load %arg6[%c0_14, %c0_15] : memref<128x128xbf16, #tpu.memory_space<vmem>>, vector<128x128xbf16>
    %c0_16 = arith.constant 0 : index
    %c0_17 = arith.constant 0 : index
    %28 = vector.load %arg7[%c0_16, %c0_17] : memref<1x128xf32, #tpu.memory_space<vmem>>, vector<1x128xf32>
    %29 = arith.truncf %26 : vector<8x128xf32> to vector<8x128xbf16>
    %cst_18 = arith.constant dense<0.000000e+00> : vector<8x128xf32>
    %30 = tpu.matmul %29, %27, %cst_18 {dimension_numbers = #tpu.dot_dimension_numbers<[1], [0], [0], [1], [0, 0, 1, 1], [], []>} : vector<8x128xbf16>, vector<128x128xbf16>, vector<8x128xf32> -> vector<8x128xf32>
    %31 = vector.broadcast %28 : vector<1x128xf32> to vector<8x128xf32>
    %32 = arith.addf %30, %31 : vector<8x128xf32>
    %c0_19 = arith.constant 0 : index
    %c0_20 = arith.constant 0 : index
    %33 = vector.load %arg8[%c0_19, %c0_20] : memref<8x128xf32, #tpu.memory_space<vmem>>, vector<8x128xf32>
    tpu.vector_store %arg8[%c0_19, %c0_20], %32 {strides = array<i32>} : memref<8x128xf32, #tpu.memory_space<vmem>>, vector<8x128xf32>,
    return
  }
  func.func @transform_0(%arg0: i32) -> (i32, i32) {
    %c0_i32 = arith.constant 0 : i32
    %c0_i32_0 = arith.constant 0 : i32
    return %arg0, %c0_i32 : i32, i32
  }
  func.func @transform_1(%arg0: i32) -> (i32, i32) {
    %c0_i32 = arith.constant 0 : i32
    %c0_i32_0 = arith.constant 0 : i32
    %c0_i32_1 = arith.constant 0 : i32
    return %c0_i32, %c0_i32_0 : i32, i32
  }
  func.func @transform_2(%arg0: i32) -> (i32, i32) {
    %c0_i32 = arith.constant 0 : i32
    %c0_i32_0 = arith.constant 0 : i32
    %c0_i32_1 = arith.constant 0 : i32
    return %c0_i32, %c0_i32_0 : i32, i32
  }
  func.func @transform_3(%arg0: i32) -> (i32, i32) {
    %c0_i32 = arith.constant 0 : i32
    %c0_i32_0 = arith.constant 0 : i32
    %c0_i32_1 = arith.constant 0 : i32
    return %c0_i32, %c0_i32_0 : i32, i32
  }
  func.func @transform_4(%arg0: i32) -> (i32, i32) {
    %c0_i32 = arith.constant 0 : i32
    %c0_i32_0 = arith.constant 0 : i32
    %c0_i32_1 = arith.constant 0 : i32
    return %c0_i32, %c0_i32_0 : i32, i32
  }
  func.func @transform_5(%arg0: i32) -> (i32, i32) {
    %c0_i32 = arith.constant 0 : i32
    %c0_i32_0 = arith.constant 0 : i32
    %c0_i32_1 = arith.constant 0 : i32
    return %c0_i32, %c0_i32_0 : i32, i32
  }
  func.func @transform_6(%arg0: i32) -> (i32, i32) {
    %c0_i32 = arith.constant 0 : i32
    %c0_i32_0 = arith.constant 0 : i32
    %c0_i32_1 = arith.constant 0 : i32
    return %c0_i32, %c0_i32_0 : i32, i32
  }
  func.func @transform_7(%arg0: i32) -> (i32, i32) {
    %c0_i32 = arith.constant 0 : i32
    %c0_i32_0 = arith.constant 0 : i32
    return %arg0, %c0_i32 : i32, i32
  }
}

</mosaic_0001>

<llo_original>
// kernel: tpu_custom_call.1
$region0: #{tpu_custom_call.1}
  #allocation0 [shape = 'u32[]', space=smem, size = 0x4, offset = 0x4, fixed_abs, tag = 'smem constant byte address 0x4 - core index']
  #allocation1 [shape = 'u32[144,128]{1,0:T(1,128)}', space=vmem, size = 0x12000, scoped, tag = 'internal scratch']
  %s0 = inlined_call_operand.hbm [shape: f32[8,128], index: 0, kind: input, shape index: {}]
  %s1 = inlined_call_operand.hbm [shape: bf16[128,256], index: 1, kind: input, shape index: {}]
  %s2 = inlined_call_operand.vmem [shape: f32[1,128], index: 2, kind: input, shape index: {}]
  %s3 = inlined_call_operand.hbm [shape: bf16[128,128], index: 3, kind: input, shape index: {}]
  %s4 = inlined_call_operand.vmem [shape: f32[1,128], index: 4, kind: input, shape index: {}]
  %s5 = inlined_call_operand.hbm [shape: bf16[128,128], index: 5, kind: input, shape index: {}]
  %s6 = inlined_call_operand.vmem [shape: f32[1,128], index: 6, kind: input, shape index: {}]
  %s7 = inlined_call_operand.hbm [shape: f32[8,128], index: 7, kind: output, shape index: {}]
  %s8 = sld [smem:[#allocation0]]
  $region54: #{tpu_custom_call.1} parent=0
    _
  %s10 = ssub.s32 1, %s8
  %s11 = scalar_select 0, %s10, %s8
  $region1: #{tpu_custom_call.1} parent=0
    #allocation2 [shape = 'u8[4096]{0}', space=vmem, size = 0x1000, scoped, tag = 'input window, operand 0, single buffered']
    #allocation3 [shape = 's32[1]{0}', space=sflag, size = 0x4, scoped, tag = 'scoped memory for tpu_custom_call.1']
    #allocation4 [shape = 's32[1]{0}', space=sflag, size = 0x4, scoped, tag = 'scoped memory for tpu_custom_call.1']
    #allocation5 [shape = 'u8[65536]{0}', space=vmem, size = 0x10000, scoped, tag = 'input window, operand 1, single buffered']
    #allocation6 [shape = 's32[1]{0}', space=sflag, size = 0x4, scoped, tag = 'scoped memory for tpu_custom_call.1']
    #allocation7 [shape = 'u8[32768]{0}', space=vmem, size = 0x8000, scoped, tag = 'input window, operand 3, single buffered']
    #allocation8 [shape = 'u8[32768]{0}', space=vmem, size = 0x8000, scoped, tag = 'input window, operand 5, single buffered']
    #allocation9 [shape = 's32[1]{0}', space=sflag, size = 0x4, scoped, tag = 'scoped memory for tpu_custom_call.1']
    #allocation10 [shape = 'u8[4096]{0}', space=vmem, size = 0x1000, scoped, tag = 'output window, operand 0, single buffered']
    %12 = vsyncpa [#allocation3], 0
    %13 = vsyncpa [#allocation6], 0
    %14 = vsyncpa [#allocation9], 0
    %15 = vsyncpa [#allocation4], 0
    // Predicated region
    $region2: #{tpu_custom_call.1} parent=1 // pred_check
      _
    $region3: #{tpu_custom_call.1} parent=1 // pred_check_branch
      %17 = sbr.rel (0) target = $region5
    $region4: #{tpu_custom_call.1} parent=1 // pred_region
      %s19 = ssub.s32 128, 128
      %20 = vsyncadd [#allocation3], %s19
      %s22 = sshll.u32 [#allocation2], 4
      %s23 = int_to_ptr.vmem [resolvable:$true] %s22
      %25 = dma.hbm_to_vmem [thread:$0]  %s0, 128, %s23, [#allocation3]
    $region5: #{tpu_custom_call.1} parent=1 // pred_fallthru
      _
    // Predicated region
    $region6: #{tpu_custom_call.1} parent=1 // pred_check
      _
    $region7: #{tpu_custom_call.1} parent=1 // pred_check_branch
      %27 = sbr.rel (0) target = $region9
    $region8: #{tpu_custom_call.1} parent=1 // pred_region
      %s29 = ssub.s32 2048, 2048
      %30 = vsyncadd [#allocation6], %s29
      %s31 = sshll.u32 [#allocation5], 4
      %s32 = int_to_ptr.vmem [resolvable:$true] %s31
      %37 = dma.hbm_to_vmem [thread:$0]  %s1, 2048, %s32, [#allocation6], 128, 128, 8
    $region9: #{tpu_custom_call.1} parent=1 // pred_fallthru
      _
    // Predicated region
    $region10: #{tpu_custom_call.1} parent=1 // pred_check
      _
    $region11: #{tpu_custom_call.1} parent=1 // pred_check_branch
      %39 = sbr.rel (0) target = $region13
    $region12: #{tpu_custom_call.1} parent=1 // pred_region
      _
    $region13: #{tpu_custom_call.1} parent=1 // pred_fallthru
      _
    // Predicated region
    $region14: #{tpu_custom_call.1} parent=1 // pred_check
      _
    $region15: #{tpu_custom_call.1} parent=1 // pred_check_branch
      %41 = sbr.rel (0) target = $region17
    $region16: #{tpu_custom_call.1} parent=1 // pred_region
      %s43 = ssub.s32 1024, 1024
      %44 = vsyncadd [#allocation6], %s43
      %s45 = sshll.u32 [#allocation7], 4
      %s46 = int_to_ptr.vmem [resolvable:$true] %s45
      %51 = dma.hbm_to_vmem [thread:$0]  %s3, 1024, %s46, [#allocation6], 64, 64, 4
    $region17: #{tpu_custom_call.1} parent=1 // pred_fallthru
      _
    // Predicated region
    $region18: #{tpu_custom_call.1} parent=1 // pred_check
      _
    $region19: #{tpu_custom_call.1} parent=1 // pred_check_branch
      %53 = sbr.rel (0) target = $region21
    $region20: #{tpu_custom_call.1} parent=1 // pred_region
      _
    $region21: #{tpu_custom_call.1} parent=1 // pred_fallthru
      _
    // Predicated region
    $region22: #{tpu_custom_call.1} parent=1 // pred_check
      _
    $region23: #{tpu_custom_call.1} parent=1 // pred_check_branch
      %55 = sbr.rel (0) target = $region25
    $region24: #{tpu_custom_call.1} parent=1 // pred_region
      %s57 = ssub.s32 1024, 1024
      %58 = vsyncadd [#allocation9], %s57
      %s59 = sshll.u32 [#allocation8], 4
      %s60 = int_to_ptr.vmem [resolvable:$true] %s59
      %65 = dma.hbm_to_vmem [thread:$0]  %s5, 1024, %s60, [#allocation9], 64, 64, 4
    $region25: #{tpu_custom_call.1} parent=1 // pred_fallthru
      _
    // Predicated region
    $region26: #{tpu_custom_call.1} parent=1 // pred_check
      _
    $region27: #{tpu_custom_call.1} parent=1 // pred_check_branch
      %67 = sbr.rel (0) target = $region29
    $region28: #{tpu_custom_call.1} parent=1 // pred_region
      _
    $region29: #{tpu_custom_call.1} parent=1 // pred_fallthru
      _
    // Predicated region
    $region30: #{tpu_custom_call.1} parent=1 // pred_check
      _
    $region31: #{tpu_custom_call.1} parent=1 // pred_check_branch
      %69 = sbr.rel (0) target = $region33
    $region32: #{tpu_custom_call.1} parent=1 // pred_region
      %70 = dma.done [#allocation3], 128
    $region33: #{tpu_custom_call.1} parent=1 // pred_fallthru
      _
    // Predicated region
    $region34: #{tpu_custom_call.1} parent=1 // pred_check
      _
    $region35: #{tpu_custom_call.1} parent=1 // pred_check_branch
      %72 = sbr.rel (0) target = $region37
    $region36: #{tpu_custom_call.1} parent=1 // pred_region
      %73 = dma.done [#allocation6], 2048
    $region37: #{tpu_custom_call.1} parent=1 // pred_fallthru
      _
    // Predicated region
    $region38: #{tpu_custom_call.1} parent=1 // pred_check
      _
    $region39: #{tpu_custom_call.1} parent=1 // pred_check_branch
      %75 = sbr.rel (0) target = $region41
    $region40: #{tpu_custom_call.1} parent=1 // pred_region
      %76 = dma.done [#allocation6], 1024
    $region41: #{tpu_custom_call.1} parent=1 // pred_fallthru
      _
    // Predicated region
    $region42: #{tpu_custom_call.1} parent=1 // pred_check
      _
    $region43: #{tpu_custom_call.1} parent=1 // pred_check_branch
      %78 = sbr.rel (0) target = $region45
    $region44: #{tpu_custom_call.1} parent=1 // pred_region
      %79 = dma.done [#allocation9], 1024
    $region45: #{tpu_custom_call.1} parent=1 // pred_fallthru
      _
    %v81 = vld [vmem:[#allocation2] sm:$0xff]
    %v82 = vld [vmem:[#allocation5] sm:$0xff]
    %v83 = vld [vmem:[#allocation5 + $0x8] sm:$0xff]
    %v84 = vld [vmem:[#allocation5 + $0x10] sm:$0xff]
    %v85 = vld [vmem:[#allocation5 + $0x18] sm:$0xff]
    %v86 = vld [vmem:[#allocation5 + $0x20] sm:$0xff]
    %v87 = vld [vmem:[#allocation5 + $0x28] sm:$0xff]
    %v88 = vld [vmem:[#allocation5 + $0x30] sm:$0xff]
    %v89 = vld [vmem:[#allocation5 + $0x38] sm:$0xff]
    %v90 = vld [vmem:[#allocation5 + $0x40] sm:$0xff]
    %v91 = vld [vmem:[#allocation5 + $0x48] sm:$0xff]
    %v92 = vld [vmem:[#allocation5 + $0x50] sm:$0xff]
    %v93 = vld [vmem:[#allocation5 + $0x58] sm:$0xff]
    %v94 = vld [vmem:[#allocation5 + $0x60] sm:$0xff]
    %v95 = vld [vmem:[#allocation5 + $0x68] sm:$0xff]
    %v96 = vld [vmem:[#allocation5 + $0x70] sm:$0xff]
    %v97 = vld [vmem:[#allocation5 + $0x78] sm:$0xff]
    %v98 = vld [vmem:[%s2] sm:$0x1]
    %v99 = vpack.c.bf16 %v81, %v81
    %v116 = vunpack.c.l.b16 %v82
    %v117 = vunpack.c.h.b16 %v82
    %v118 = vunpack.c.l.b16 %v83
    %v119 = vunpack.c.h.b16 %v83
    %v120 = vunpack.c.l.b16 %v84
    %v121 = vunpack.c.h.b16 %v84
    %v122 = vunpack.c.l.b16 %v85
    %v123 = vunpack.c.h.b16 %v85
    %v124 = vunpack.c.l.b16 %v86
    %v125 = vunpack.c.h.b16 %v86
    %v126 = vunpack.c.l.b16 %v87
    %v127 = vunpack.c.h.b16 %v87
    %v128 = vunpack.c.l.b16 %v88
    %v129 = vunpack.c.h.b16 %v88
    %v130 = vunpack.c.l.b16 %v89
    %v131 = vunpack.c.h.b16 %v89
    %v132 = vunpack.c.l.b16 %v90
    %v133 = vunpack.c.h.b16 %v90
    %v134 = vunpack.c.l.b16 %v91
    %v135 = vunpack.c.h.b16 %v91
    %v136 = vunpack.c.l.b16 %v92
    %v137 = vunpack.c.h.b16 %v92
    %v138 = vunpack.c.l.b16 %v93
    %v139 = vunpack.c.h.b16 %v93
    %v140 = vunpack.c.l.b16 %v94
    %v141 = vunpack.c.h.b16 %v94
    %v142 = vunpack.c.l.b16 %v95
    %v143 = vunpack.c.h.b16 %v95
    %v144 = vunpack.c.l.b16 %v96
    %v145 = vunpack.c.h.b16 %v96
    %v146 = vunpack.c.l.b16 %v97
    %v147 = vunpack.c.h.b16 %v97
    %v148 = vpack.c.b16 %v118, %v116
    %v149 = vpack.c.b16 %v119, %v117
    %v150 = vpack.c.b16 %v122, %v120
    %v151 = vpack.c.b16 %v123, %v121
    %v152 = vpack.c.b16 %v126, %v124
    %v153 = vpack.c.b16 %v127, %v125
    %v154 = vpack.c.b16 %v130, %v128
    %v155 = vpack.c.b16 %v131, %v129
    %v156 = vpack.c.b16 %v134, %v132
    %v157 = vpack.c.b16 %v135, %v133
    %v158 = vpack.c.b16 %v138, %v136
    %v159 = vpack.c.b16 %v139, %v137
    %v160 = vpack.c.b16 %v142, %v140
    %v161 = vpack.c.b16 %v143, %v141
    %v162 = vpack.c.b16 %v146, %v144
    %v163 = vpack.c.b16 %v147, %v145
    %180 = vmatprep.subr.bf16.mxu0 %v149
    %181 = vmatpush1.bf16.msra.mxu0 %v148
    %182 = vmatprep.subr.bf16.mxu0 %v151
    %183 = vmatpush1.bf16.msra.mxu0 %v150
    %184 = vmatprep.subr.bf16.mxu0 %v153
    %185 = vmatpush1.bf16.msra.mxu0 %v152
    %186 = vmatprep.subr.bf16.mxu0 %v155
    %187 = vmatpush1.bf16.msra.mxu0 %v154
    %188 = vmatprep.subr.bf16.mxu0 %v157
    %189 = vmatpush1.bf16.msra.mxu0 %v156
    %190 = vmatprep.subr.bf16.mxu0 %v159
    %191 = vmatpush1.bf16.msra.mxu0 %v158
    %192 = vmatprep.subr.bf16.mxu0 %v161
    %193 = vmatpush1.bf16.msra.mxu0 %v160
    %194 = vmatprep.subr.bf16.mxu0 %v163
    %195 = vmatpush1.bf16.msra.mxu0 %v162
    %196 = vmatprep.subr.bf16.mxu0 0
    %197 = vmatpush1.bf16.msra.mxu0 0
    %198 = vmatprep.subr.bf16.mxu0 0
    %199 = vmatpush1.bf16.msra.mxu0 0
    %200 = vmatprep.subr.bf16.mxu0 0
    %201 = vmatpush1.bf16.msra.mxu0 0
    %202 = vmatprep.subr.bf16.mxu0 0
    %203 = vmatpush1.bf16.msra.mxu0 0
    %204 = vmatprep.subr.bf16.mxu0 0
    %205 = vmatpush1.bf16.msra.mxu0 0
    %206 = vmatprep.subr.bf16.mxu0 0
    %207 = vmatpush1.bf16.msra.mxu0 0
    %208 = vmatprep.subr.bf16.mxu0 0
    %209 = vmatpush1.bf16.msra.mxu0 0
    %210 = vmatprep.subr.bf16.mxu0 0
    %211 = vmatpush1.bf16.msra.mxu0 0
    %212 = vmatprep.mubr.bf16.mxu0 0
    %213 = vmatmul.mubr.bf16.gmra.mrb[0].mxu0 %v99
    %v214 = vpop.f32.mrb[0].mxu0
    %v215 = vadd.f32 0.0, %v214
    %v216 = vpop.f32.mrb[0].mxu0
    %v217 = vadd.f32 0.0, %v216
    %v218 = vpop.f32.mrb[0].mxu0
    %v219 = vpop.f32.mrb[0].mxu0
    %220 = vdwg.mxu0
    %v222 = vlaneseq
    %v223 = vshrl.u32 %v222, 7
    %v224 = vsub.s32 0, %v223
    %v225 = vrot.slane %v98, %v224
    %v227 = vadd.f32 %v215, %v225
    %vm228 = vcmp.ge.f32.partialorder %v227, 0.0
    %v229 = vmul.f32 %v227, 0.01
    %v230 = vsel %vm228, %v227, %v229
    %v231 = vadd.f32 %v230, %v217
    %v232 = vld [vmem:[#allocation7] sm:$0xf]
    %v233 = vld [vmem:[#allocation7 + $0x4] sm:$0xf]
    %v234 = vld [vmem:[#allocation7 + $0x8] sm:$0xf]
    %v235 = vld [vmem:[#allocation7 + $0xc] sm:$0xf]
    %v236 = vld [vmem:[#allocation7 + $0x10] sm:$0xf]
    %v237 = vld [vmem:[#allocation7 + $0x14] sm:$0xf]
    %v238 = vld [vmem:[#allocation7 + $0x18] sm:$0xf]
    %v239 = vld [vmem:[#allocation7 + $0x1c] sm:$0xf]
    %v240 = vld [vmem:[#allocation7 + $0x20] sm:$0xf]
    %v241 = vld [vmem:[#allocation7 + $0x24] sm:$0xf]
    %v242 = vld [vmem:[#allocation7 + $0x28] sm:$0xf]
    %v243 = vld [vmem:[#allocation7 + $0x2c] sm:$0xf]
    %v244 = vld [vmem:[#allocation7 + $0x30] sm:$0xf]
    %v245 = vld [vmem:[#allocation7 + $0x34] sm:$0xf]
    %v246 = vld [vmem:[#allocation7 + $0x38] sm:$0xf]
    %v247 = vld [vmem:[#allocation7 + $0x3c] sm:$0xf]
    %v248 = vld [vmem:[%s4] sm:$0x1]
    %v249 = vpack.c.bf16 %v231, %v231
    %v251 = vlaneseq
    %v252 = vshrl.u32 %v251, 7
    %v253 = vsub.s32 0, %v252
    %v254 = vrot.slane %v248, %v253
    %v272 = vunpack.c.l.b16 %v232
    %v273 = vunpack.c.l.b16 %v233
    %v274 = vunpack.c.l.b16 %v234
    %v275 = vunpack.c.l.b16 %v235
    %v276 = vunpack.c.l.b16 %v236
    %v277 = vunpack.c.l.b16 %v237
    %v278 = vunpack.c.l.b16 %v238
    %v279 = vunpack.c.l.b16 %v239
    %v280 = vunpack.c.l.b16 %v240
    %v281 = vunpack.c.l.b16 %v241
    %v282 = vunpack.c.l.b16 %v242
    %v283 = vunpack.c.l.b16 %v243
    %v284 = vunpack.c.l.b16 %v244
    %v285 = vunpack.c.l.b16 %v245
    %v286 = vunpack.c.l.b16 %v246
    %v287 = vunpack.c.l.b16 %v247
    %v288 = vpack.c.b16 %v273, %v272
    %v289 = vpack.c.b16 %v275, %v274
    %v290 = vpack.c.b16 %v277, %v276
    %v291 = vpack.c.b16 %v279, %v278
    %v292 = vpack.c.b16 %v281, %v280
    %v293 = vpack.c.b16 %v283, %v282
    %v294 = vpack.c.b16 %v285, %v284
    %v295 = vpack.c.b16 %v287, %v286
    %304 = vmatprep.subr.bf16.mxu0 0
    %305 = vmatpush1.bf16.msra.mxu0 %v288
    %306 = vmatprep.subr.bf16.mxu0 0
    %307 = vmatpush1.bf16.msra.mxu0 %v289
    %308 = vmatprep.subr.bf16.mxu0 0
    %309 = vmatpush1.bf16.msra.mxu0 %v290
    %310 = vmatprep.subr.bf16.mxu0 0
    %311 = vmatpush1.bf16.msra.mxu0 %v291
    %312 = vmatprep.subr.bf16.mxu0 0
    %313 = vmatpush1.bf16.msra.mxu0 %v292
    %314 = vmatprep.subr.bf16.mxu0 0
    %315 = vmatpush1.bf16.msra.mxu0 %v293
    %316 = vmatprep.subr.bf16.mxu0 0
    %317 = vmatpush1.bf16.msra.mxu0 %v294
    %318 = vmatprep.subr.bf16.mxu0 0
    %319 = vmatpush1.bf16.msra.mxu0 %v295
    %320 = vmatprep.subr.bf16.mxu0 0
    %321 = vmatpush1.bf16.msra.mxu0 0
    %322 = vmatprep.subr.bf16.mxu0 0
    %323 = vmatpush1.bf16.msra.mxu0 0
    %324 = vmatprep.subr.bf16.mxu0 0
    %325 = vmatpush1.bf16.msra.mxu0 0
    %326 = vmatprep.subr.bf16.mxu0 0
    %327 = vmatpush1.bf16.msra.mxu0 0
    %328 = vmatprep.subr.bf16.mxu0 0
    %329 = vmatpush1.bf16.msra.mxu0 0
    %330 = vmatprep.subr.bf16.mxu0 0
    %331 = vmatpush1.bf16.msra.mxu0 0
    %332 = vmatprep.subr.bf16.mxu0 0
    %333 = vmatpush1.bf16.msra.mxu0 0
    %334 = vmatprep.subr.bf16.mxu0 0
    %335 = vmatpush1.bf16.msra.mxu0 0
    %336 = vmatprep.mubr.bf16.mxu0 0
    %337 = vmatmul.mubr.bf16.gmra.mrb[0].mxu0 %v249
    %v338 = vpop.f32.mrb[0].mxu0
    %v339 = vadd.f32 %v254, %v338
    %v340 = vpop.f32.mrb[0].mxu0
    %v341 = vpop.f32.mrb[0].mxu0
    %v342 = vpop.f32.mrb[0].mxu0
    %343 = vdwg.mxu0
    %vm344 = vcmp.ge.f32.partialorder %v339, 0.0
    %v345 = vmul.f32 %v339, 0.01
    %v346 = vsel %vm344, %v339, %v345
    %v347 = vadd.f32 %v346, %v231
    %v348 = vld [vmem:[#allocation8] sm:$0xf]
    %v349 = vld [vmem:[#allocation8 + $0x4] sm:$0xf]
    %v350 = vld [vmem:[#allocation8 + $0x8] sm:$0xf]
    %v351 = vld [vmem:[#allocation8 + $0xc] sm:$0xf]
    %v352 = vld [vmem:[#allocation8 + $0x10] sm:$0xf]
    %v353 = vld [vmem:[#allocation8 + $0x14] sm:$0xf]
    %v354 = vld [vmem:[#allocation8 + $0x18] sm:$0xf]
    %v355 = vld [vmem:[#allocation8 + $0x1c] sm:$0xf]
    %v356 = vld [vmem:[#allocation8 + $0x20] sm:$0xf]
    %v357 = vld [vmem:[#allocation8 + $0x24] sm:$0xf]
    %v358 = vld [vmem:[#allocation8 + $0x28] sm:$0xf]
    %v359 = vld [vmem:[#allocation8 + $0x2c] sm:$0xf]
    %v360 = vld [vmem:[#allocation8 + $0x30] sm:$0xf]
    %v361 = vld [vmem:[#allocation8 + $0x34] sm:$0xf]
    %v362 = vld [vmem:[#allocation8 + $0x38] sm:$0xf]
    %v363 = vld [vmem:[#allocation8 + $0x3c] sm:$0xf]
    %v364 = vld [vmem:[%s6] sm:$0x1]
    %v365 = vpack.c.bf16 %v347, %v347
    %v367 = vlaneseq
    %v368 = vshrl.u32 %v367, 7
    %v369 = vsub.s32 0, %v368
    %v370 = vrot.slane %v364, %v369
    %v388 = vunpack.c.l.b16 %v348
    %v389 = vunpack.c.l.b16 %v349
    %v390 = vunpack.c.l.b16 %v350
    %v391 = vunpack.c.l.b16 %v351
    %v392 = vunpack.c.l.b16 %v352
    %v393 = vunpack.c.l.b16 %v353
    %v394 = vunpack.c.l.b16 %v354
    %v395 = vunpack.c.l.b16 %v355
    %v396 = vunpack.c.l.b16 %v356
    %v397 = vunpack.c.l.b16 %v357
    %v398 = vunpack.c.l.b16 %v358
    %v399 = vunpack.c.l.b16 %v359
    %v400 = vunpack.c.l.b16 %v360
    %v401 = vunpack.c.l.b16 %v361
    %v402 = vunpack.c.l.b16 %v362
    %v403 = vunpack.c.l.b16 %v363
    %v404 = vpack.c.b16 %v389, %v388
    %v405 = vpack.c.b16 %v391, %v390
    %v406 = vpack.c.b16 %v393, %v392
    %v407 = vpack.c.b16 %v395, %v394
    %v408 = vpack.c.b16 %v397, %v396
    %v409 = vpack.c.b16 %v399, %v398
    %v410 = vpack.c.b16 %v401, %v400
    %v411 = vpack.c.b16 %v403, %v402
    %420 = vmatprep.subr.bf16.mxu0 0
    %421 = vmatpush1.bf16.msra.mxu0 %v404
    %422 = vmatprep.subr.bf16.mxu0 0
    %423 = vmatpush1.bf16.msra.mxu0 %v405
    %424 = vmatprep.subr.bf16.mxu0 0
    %425 = vmatpush1.bf16.msra.mxu0 %v406
    %426 = vmatprep.subr.bf16.mxu0 0
    %427 = vmatpush1.bf16.msra.mxu0 %v407
    %428 = vmatprep.subr.bf16.mxu0 0
    %429 = vmatpush1.bf16.msra.mxu0 %v408
    %430 = vmatprep.subr.bf16.mxu0 0
    %431 = vmatpush1.bf16.msra.mxu0 %v409
    %432 = vmatprep.subr.bf16.mxu0 0
    %433 = vmatpush1.bf16.msra.mxu0 %v410
    %434 = vmatprep.subr.bf16.mxu0 0
    %435 = vmatpush1.bf16.msra.mxu0 %v411
    %436 = vmatprep.subr.bf16.mxu0 0
    %437 = vmatpush1.bf16.msra.mxu0 0
    %438 = vmatprep.subr.bf16.mxu0 0
    %439 = vmatpush1.bf16.msra.mxu0 0
    %440 = vmatprep.subr.bf16.mxu0 0
    %441 = vmatpush1.bf16.msra.mxu0 0
    %442 = vmatprep.subr.bf16.mxu0 0
    %443 = vmatpush1.bf16.msra.mxu0 0
    %444 = vmatprep.subr.bf16.mxu0 0
    %445 = vmatpush1.bf16.msra.mxu0 0
    %446 = vmatprep.subr.bf16.mxu0 0
    %447 = vmatpush1.bf16.msra.mxu0 0
    %448 = vmatprep.subr.bf16.mxu0 0
    %449 = vmatpush1.bf16.msra.mxu0 0
    %450 = vmatprep.subr.bf16.mxu0 0
    %451 = vmatpush1.bf16.msra.mxu0 0
    %452 = vmatprep.mubr.bf16.mxu0 0
    %453 = vmatmul.mubr.bf16.gmra.mrb[0].mxu0 %v365
    %v454 = vpop.f32.mrb[0].mxu0
    %v455 = vadd.f32 %v370, %v454
    %v456 = vpop.f32.mrb[0].mxu0
    %v457 = vpop.f32.mrb[0].mxu0
    %v458 = vpop.f32.mrb[0].mxu0
    %459 = vdwg.mxu0
    %460 = vst [vmem:[#allocation10] sm:$0xff] %v455
    // Predicated region
    $region46: #{tpu_custom_call.1} parent=1 // pred_check
      _
    $region47: #{tpu_custom_call.1} parent=1 // pred_check_branch
      %462 = sbr.rel (0) target = $region49
    $region48: #{tpu_custom_call.1} parent=1 // pred_region
      %s464 = ssub.s32 128, 128
      %465 = vsyncadd [#allocation4], %s464
      %s467 = sshll.u32 [#allocation10], 4
      %s468 = int_to_ptr.vmem [resolvable:$true] %s467
      %470 = dma.vmem_to_hbm [thread:$0]  %s468, 128, %s7, [#allocation4]
    $region49: #{tpu_custom_call.1} parent=1 // pred_fallthru
      _
    // Predicated region
    $region50: #{tpu_custom_call.1} parent=1 // pred_check
      _
    $region51: #{tpu_custom_call.1} parent=1 // pred_check_branch
      %472 = sbr.rel (0) target = $region53
    $region52: #{tpu_custom_call.1} parent=1 // pred_region
      %473 = dma.done [#allocation4], 128
    $region53: #{tpu_custom_call.1} parent=1 // pred_fallthru
      _
    %474 = vsyncpa [#allocation3], 1
    %475 = vsyncpa [#allocation6], 1
    %476 = vsyncpa [#allocation9], 1
    %477 = vsyncpa [#allocation4], 1

</llo_original>
